<compile_context>
chip_gen: v5e
topology: v5e:2x2
jax: 0.10.0
libtpu: 0.0.40
codegen_flags: <defaults>
</compile_context>

<pallas_src>
import functools

import jax
import jax.numpy as jnp
from jax.experimental import pallas as pl
from jax.experimental.pallas import tpu as pltpu

_LANES = 128


def _round_up(n, m):
    return ((n + m - 1) // m) * m


def _tpu_config():
    """(num_tensorcores, target_block_rows) for the current backend.

    Best-effort device_kind sniffing; the defaults (1, 4096) are *correct*
    (if not maximally parallel) on every TPU generation.
    """
    num_cores = 1
    target_rows = 4096          # (4096, 128) f32 = 2 MiB per input block
    try:
        kind = str(jax.devices()[0].device_kind).lower()
    except Exception:
        return num_cores, target_rows
    if ("v4" in kind) or ("v5p" in kind) or ("7" in kind):
        # Megacore (v4/v5p) and v7x parts expose two TensorCores per device;
        # the leading "parallel" grid axis lets Pallas shard rows across them.
        num_cores = 2
    if "7" in kind:
        # ~3.2 TB/s HBM per TC: larger blocks to amortise ~0.35us/step grid
        # overhead.  8192 rows f32 -> 2 in x 2 bufs x 4 MiB = 16 MiB inputs.
        target_rows = 8192
    return num_cores, target_rows


def _abs_sum_kernel(x_ref, y_ref, o_ref, acc_ref, *,
                    block_rows, blocks_per_core, total_blocks, rows, ragged):
    a = pl.program_id(0)   # core-split axis ("parallel")
    i = pl.program_id(1)   # streaming / reduction axis ("arbitrary")

    @pl.when(i == 0)
    def _():
        acc_ref[...] = jnp.zeros_like(acc_ref)

    d = y_ref[...].astype(jnp.float32) - x_ref[...].astype(jnp.float32)
    # sqrt(square(d)) == |d| for all finite d (and avoids the spurious
    # overflow of squaring first); pure VPU work.
    v = jnp.abs(d)

    def _accumulate(vals):
        # (block_rows, 128) -> (block_rows//8, 8, 128) follows the (8, 128)
        # tile boundary (no relayout); the axis-0 sum is pure vreg-wise VPU
        # adds into the small (8, 128) accumulator.
        acc_ref[...] += vals.reshape(-1, 8, _LANES).sum(axis=0)

    if ragged:
        gi = a * blocks_per_core + i   # unclamped global block index

        # Fast path: every block except the last real block (and any clamped
        # duplicates that map onto it) is fully valid -> no masking work.
        @pl.when(gi < total_blocks - 1)
        def _():
            _accumulate(v)

        # Tail path: mask rows >= rows.  For clamped duplicate blocks
        # (gi >= total_blocks) every row is masked -> contributes 0.
        @pl.when(gi >= total_blocks - 1)
        def _():
            row_ids = gi * block_rows + jax.lax.broadcasted_iota(
                jnp.int32, v.shape, 0)
            _accumulate(jnp.where(row_ids < rows, v, 0.0))
    else:
        _accumulate(v)

    @pl.when(i == pl.num_programs(1) - 1)
    def _():
        # Single unmasked lane-dense (8, 128) store per core; the cross-lane
        # reduce of this tiny block happens in the wrapper.
        o_ref[...] = acc_ref[...]


def logistic_loss(x, y):
    """mean(sqrt((x - y)**2)) over all elements (i.e. mean |x - y|)."""
    assert x.shape == y.shape
    total_n = x.size
    if total_n == 0:
        return jnp.float32(float("nan"))   # matches torch.mean of empty

    num_cores, target_rows = _tpu_config()

    xf = x.reshape(-1)
    yf = y.reshape(-1)

    aligned_n = (total_n // _LANES) * _LANES
    tail_n = total_n - aligned_n

    # <=127-element tail handled in plain XLA instead of padding/copying the
    # full arrays.  (For non-aligned sizes the aligned-prefix slice below may
    # still copy in XLA, but it replaces the strictly-worse full jnp.pad; the
    # common 128-divisible case is a zero-copy reshape.)
    tail_sum = None
    if tail_n:
        tail_sum = jnp.sum(jnp.abs(xf[aligned_n:].astype(jnp.float32)
                                   - yf[aligned_n:].astype(jnp.float32)))

    if aligned_n == 0:
        return tail_sum / jnp.float32(total_n)

    rows = aligned_n // _LANES
    if tail_n:
        x2 = xf[:aligned_n].reshape(rows, _LANES)
        y2 = yf[:aligned_n].reshape(rows, _LANES)
    else:
        x2 = xf.reshape(rows, _LANES)   # free reshape, no HBM copy
        y2 = yf.reshape(rows, _LANES)

    block_rows = min(target_rows, _round_up(rows, 8))
    total_blocks = pl.cdiv(rows, block_rows)
    blocks_per_core = pl.cdiv(total_blocks, num_cores)
    # Any grid step whose block would fall (partly or fully) outside the array
    # is clamped to the last valid block (keeps the DMA in bounds); invalid
    # rows are masked in-kernel (gated to the last/clamped block only).
    ragged = (total_blocks * block_rows != rows) or (
        blocks_per_core * num_cores != total_blocks)

    def in_map(a, i):
        return (jnp.minimum(a * blocks_per_core + i, total_blocks - 1), 0)

    in_spec = pl.BlockSpec((block_rows, _LANES), in_map)

    # 2 inputs x 2 pipeline buffers per block, plus generous headroom for the
    # (8,128) accumulator, output buffers and compiler-internal scratch.
    in_block_bytes = block_rows * _LANES * x.dtype.itemsize
    vmem_limit = int(4 * in_block_bytes + (16 << 20))

    out = pl.pallas_call(
        functools.partial(
            _abs_sum_kernel,
            block_rows=block_rows,
            blocks_per_core=blocks_per_core,
            total_blocks=total_blocks,
            rows=rows,
            ragged=ragged,
        ),
        out_shape=jax.ShapeDtypeStruct((num_cores * 8, _LANES), jnp.float32),
        grid_spec=pltpu.PrefetchScalarGridSpec(
            num_scalar_prefetch=0,
            grid=(num_cores, blocks_per_core),
            in_specs=[in_spec, in_spec],
            out_specs=pl.BlockSpec((8, _LANES), lambda a, i: (a, 0)),
            scratch_shapes=[pltpu.VMEM((8, _LANES), jnp.float32)],
        ),
        compiler_params=pltpu.CompilerParams(
            dimension_semantics=("parallel", "arbitrary"),
            vmem_limit_bytes=vmem_limit,
        ),
    )(x2, y2)

    total = jnp.sum(out)
    if tail_n:
        total = total + tail_sum
    return total / jnp.float32(total_n)


if __name__ == "__main__":
    key = jax.random.PRNGKey(0)
    kx, ky, kx2, ky2 = jax.random.split(key, 4)

    loss_fn = jax.jit(logistic_loss)

    # Small NCHW-shaped inputs (numel % 128 == 0: zero-copy fast path).
    x = jax.random.normal(kx, (2, 4, 16, 16), dtype=jnp.float32)
    y = jax.random.normal(ky, (2, 4, 16, 16), dtype=jnp.float32)
    loss = loss_fn(x, y)
    jax.block_until_ready(loss)
    ref = jnp.mean(jnp.sqrt(jnp.square(x - y)))
    assert jnp.allclose(loss, ref, rtol=1e-5, atol=1e-6), (loss, ref)

    # Ragged shape (numel % 128 != 0): exercises the XLA tail path and the
    # gated in-kernel row mask.
    x2 = jax.random.normal(kx2, (3, 5, 7, 11), dtype=jnp.float32)
    y2 = jax.random.normal(ky2, (3, 5, 7, 11), dtype=jnp.float32)
    loss2 = loss_fn(x2, y2)
    jax.block_until_ready(loss2)
    ref2 = jnp.mean(jnp.sqrt(jnp.square(x2 - y2)))
    assert jnp.allclose(loss2, ref2, rtol=1e-5, atol=1e-6), (loss2, ref2)

    print("KERNEL_OK")
</pallas_src>

<mosaic_0001>
module attributes {stable_mosaic.version = 11 : i64} {
  func.func @_abs_sum_kernel(%arg0: i32, %arg1: i32, %arg2: memref<16x128xf32, #tpu.memory_space<vmem>>, %arg3: memref<16x128xf32, #tpu.memory_space<vmem>>, %arg4: memref<8x128xf32, #tpu.memory_space<vmem>>, %arg5: memref<8x128xf32, #tpu.memory_space<vmem>>) attributes {dimension_semantics = [#tpu.dimension_semantics<parallel>, #tpu.dimension_semantics<arbitrary>], iteration_bounds = array<i64: 1, 1>, scalar_prefetch = 0 : i64, scratch_operands = 1 : i64, tpu.core_type = #tpu.core_type<tc>, window_params = [{transform_indices = @transform_0, window_bounds = array<i64: 16, 128>}, {transform_indices = @transform_1, window_bounds = array<i64: 16, 128>}, {transform_indices = @transform_2, window_bounds = array<i64: 8, 128>}]} {
    %c0_i32 = arith.constant 0 : i32
    %0 = arith.cmpi eq, %arg1, %c0_i32 : i32
    %1 = arith.extui %0 : i1 to i32
    %c0_i32_0 = arith.constant 0 : i32
    %2 = arith.cmpi ne, %1, %c0_i32_0 : i32
    scf.if %2 {
      %cst_10 = arith.constant 0.000000e+00 : f32
      %15 = vector.broadcast %cst_10 : f32 to vector<8x128xf32>
      %c0_11 = arith.constant 0 : index
      %c0_12 = arith.constant 0 : index
      %16 = vector.load %arg5[%c0_11, %c0_12] : memref<8x128xf32, #tpu.memory_space<vmem>>, vector<8x128xf32>
      tpu.vector_store %arg5[%c0_11, %c0_12], %15 {strides = array<i32>} : memref<8x128xf32, #tpu.memory_space<vmem>>, vector<8x128xf32>,
    } else {
    }
    %c0 = arith.constant 0 : index
    %c0_1 = arith.constant 0 : index
    %3 = vector.load %arg3[%c0, %c0_1] : memref<16x128xf32, #tpu.memory_space<vmem>>, vector<16x128xf32>
    %c0_2 = arith.constant 0 : index
    %c0_3 = arith.constant 0 : index
    %4 = vector.load %arg2[%c0_2, %c0_3] : memref<16x128xf32, #tpu.memory_space<vmem>>, vector<16x128xf32>
    %5 = arith.subf %3, %4 : vector<16x128xf32>
    %6 = math.absf %5 : vector<16x128xf32>
    %c0_4 = arith.constant 0 : index
    %c0_5 = arith.constant 0 : index
    %7 = vector.load %arg5[%c0_4, %c0_5] : memref<8x128xf32, #tpu.memory_space<vmem>>, vector<8x128xf32>
    %8 = vector.shape_cast %6 : vector<16x128xf32> to vector<2x8x128xf32>
    %cst = arith.constant dense<0.000000e+00> : vector<8x128xf32>
    %9 = vector.multi_reduction <add>, %8, %cst [0] : vector<2x8x128xf32> to vector<8x128xf32>
    %10 = arith.addf %7, %9 : vector<8x128xf32>
    %c0_6 = arith.constant 0 : index
    %c0_7 = arith.constant 0 : index
    %11 = vector.load %arg5[%c0_6, %c0_7] : memref<8x128xf32, #tpu.memory_space<vmem>>, vector<8x128xf32>
    tpu.vector_store %arg5[%c0_6, %c0_7], %10 {strides = array<i32>} : memref<8x128xf32, #tpu.memory_space<vmem>>, vector<8x128xf32>,
    %c0_i32_8 = arith.constant 0 : i32
    %12 = arith.cmpi eq, %arg1, %c0_i32_8 : i32
    %13 = arith.extui %12 : i1 to i32
    %c0_i32_9 = arith.constant 0 : i32
    %14 = arith.cmpi ne, %13, %c0_i32_9 : i32
    scf.if %14 {
      %c0_10 = arith.constant 0 : index
      %c0_11 = arith.constant 0 : index
      %15 = vector.load %arg5[%c0_10, %c0_11] : memref<8x128xf32, #tpu.memory_space<vmem>>, vector<8x128xf32>
      %c0_12 = arith.constant 0 : index
      %c0_13 = arith.constant 0 : index
      %16 = vector.load %arg4[%c0_12, %c0_13] : memref<8x128xf32, #tpu.memory_space<vmem>>, vector<8x128xf32>
      tpu.vector_store %arg4[%c0_12, %c0_13], %15 {strides = array<i32>} : memref<8x128xf32, #tpu.memory_space<vmem>>, vector<8x128xf32>,
    } else {
    }
    return
  }
  func.func @transform_0(%arg0: i32, %arg1: i32) -> (i32, i32) {
    %c1_i32 = arith.constant 1 : i32
    %0 = arith.muli %arg0, %c1_i32 : i32
    %1 = arith.addi %0, %arg1 : i32
    %c0_i32 = arith.constant 0 : i32
    %2 = arith.minsi %1, %c0_i32 : i32
    %c0_i32_0 = arith.constant 0 : i32
    %c0_i32_1 = arith.constant 0 : i32
    return %2, %c0_i32_0 : i32, i32
  }
  func.func @transform_1(%arg0: i32, %arg1: i32) -> (i32, i32) {
    %c1_i32 = arith.constant 1 : i32
    %0 = arith.muli %arg0, %c1_i32 : i32
    %1 = arith.addi %0, %arg1 : i32
    %c0_i32 = arith.constant 0 : i32
    %2 = arith.minsi %1, %c0_i32 : i32
    %c0_i32_0 = arith.constant 0 : i32
    %c0_i32_1 = arith.constant 0 : i32
    return %2, %c0_i32_0 : i32, i32
  }
  func.func @transform_2(%arg0: i32, %arg1: i32) -> (i32, i32) {
    %c0_i32 = arith.constant 0 : i32
    %c0_i32_0 = arith.constant 0 : i32
    return %arg0, %c0_i32 : i32, i32
  }
}

</mosaic_0001>

<llo_original>
// kernel: logistic_loss.1
$region0: #{logistic_loss.1}
  #allocation0 [shape = 'u32[]', space=smem, size = 0x4, offset = 0x4, fixed_abs, tag = 'smem constant byte address 0x4 - core index']
  #allocation1 [shape = 'u32[72,128]{1,0:T(1,128)}', space=vmem, size = 0x9000, scoped, tag = 'internal scratch']
  #allocation2 [shape = 'f32[8,128]{1,0:T(8,128)}', space=vmem, size = 0x1000, scoped, tag = 'scratch operand']
  %s0 = inlined_call_operand.vmem [shape: f32[16,128], index: 0, kind: input, shape index: {}]
  %s1 = inlined_call_operand.vmem [shape: f32[16,128], index: 1, kind: input, shape index: {}]
  %s2 = inlined_call_operand.vmem [shape: f32[8,128], index: 2, kind: output, shape index: {}]
  %s3 = sld [smem:[#allocation0]]
  $region26: #{logistic_loss.1} parent=0
    _
  %s5 = ssub.s32 1, %s3
  %s6 = scalar_select 0, %s5, %s3
  // Predicated region
  $region2: #{logistic_loss.1} parent=0 // pred_check
    _
  $region3: #{logistic_loss.1} parent=0 // pred_check_branch
    %8 = sbr.rel (0) target = $region5
  $region4: #{logistic_loss.1} parent=0 // pred_region
    %s9 = sadd.s32 0, 0
    %p10 = scmp.lt.s32.totalorder %s9, 0
    %s11 = scalar_select %p10, %s9, 0
    %s12 = smul.u32 2, %s11
    %p13 = scmp.lt.s32.totalorder %s12, 1
    %s14 = scalar_select %p13, %s12, 1
    %s15 = smul.addr %s14, 8
    %s16 = scalar_lea.vmem %s0, %s15
    %s17 = sadd.s32 0, 0
    %p18 = scmp.lt.s32.totalorder %s17, 0
    %s19 = scalar_select %p18, %s17, 0
    %s20 = smul.u32 2, %s19
  $region5: #{logistic_loss.1} parent=0 // pred_fallthru
    _
  // Predicated region
  $region6: #{logistic_loss.1} parent=0 // pred_check
    _
  $region7: #{logistic_loss.1} parent=0 // pred_check_branch
    %22 = sbr.rel (0) target = $region9
  $region8: #{logistic_loss.1} parent=0 // pred_region
    %s23 = sadd.s32 0, 0
    %p24 = scmp.lt.s32.totalorder %s23, 0
    %s25 = scalar_select %p24, %s23, 0
    %s26 = smul.u32 2, %s25
    %p27 = scmp.lt.s32.totalorder %s26, 1
    %s28 = scalar_select %p27, %s26, 1
    %s29 = smul.addr %s28, 8
    %s30 = scalar_lea.vmem %s1, %s29
    %s31 = sadd.s32 0, 0
    %p32 = scmp.lt.s32.totalorder %s31, 0
    %s33 = scalar_select %p32, %s31, 0
    %s34 = smul.u32 2, %s33
  $region9: #{logistic_loss.1} parent=0 // pred_fallthru
    _
  %s35 = sadd.s32 0, 0
  %p36 = scmp.lt.s32.totalorder %s35, 0
  %s37 = scalar_select %p36, %s35, 0
  %s38 = smul.u32 2, %s37
  %p39 = scmp.lt.s32.totalorder %s38, 1
  %s40 = scalar_select %p39, %s38, 1
  %s41 = smul.addr %s40, 8
  %s42 = scalar_lea.vmem %s0, %s41
  %s43 = sadd.s32 0, 0
  %p44 = scmp.lt.s32.totalorder %s43, 0
  %s45 = scalar_select %p44, %s43, 0
  %s46 = smul.u32 2, %s45
  %p47 = scmp.lt.s32.totalorder %s46, 1
  %s48 = scalar_select %p47, %s46, 1
  %s49 = smul.addr %s48, 8
  %s50 = scalar_lea.vmem %s1, %s49
  %s51 = sadd.s32 0, 0
  %p52 = scmp.lt.s32.totalorder %s51, 0
  %s53 = scalar_select %p52, %s51, 0
  %s54 = smul.u32 2, %s53
  %p55 = scmp.lt.s32.totalorder %s54, 1
  %s56 = scalar_select %p55, %s54, 1
  %s57 = smul.addr %s56, 8
  %s58 = scalar_lea.vmem %s0, %s57
  %s59 = sadd.s32 0, 0
  %p60 = scmp.lt.s32.totalorder %s59, 0
  %s61 = scalar_select %p60, %s59, 0
  %s62 = smul.u32 2, %s61
  %s63 = sadd.s32 0, 0
  %p64 = scmp.lt.s32.totalorder %s63, 0
  %s65 = scalar_select %p64, %s63, 0
  %s66 = smul.u32 2, %s65
  %p67 = scmp.lt.s32.totalorder %s66, 1
  %s68 = scalar_select %p67, %s66, 1
  %s69 = smul.addr %s68, 8
  %s70 = scalar_lea.vmem %s1, %s69
  %s71 = sadd.s32 0, 0
  %p72 = scmp.lt.s32.totalorder %s71, 0
  %s73 = scalar_select %p72, %s71, 0
  %s74 = smul.u32 2, %s73
  %p75 = scmp.eq.s32.totalorder 0, 0
  // Predicated region
  $region10: #{logistic_loss.1} parent=0 // pred_check
    %p76 = pneg %p75
  $region11: #{logistic_loss.1} parent=0 // pred_check_branch
    %78 = sbr.rel (%p76) target = $region13
  $region12: #{logistic_loss.1} parent=0 // pred_region
    %79 = vst [vmem:[#allocation2] sm:$0xff] 0.0
  $region13: #{logistic_loss.1} parent=0 // pred_fallthru
    _
  %v80 = vld [vmem:[%s70] sm:$0xff]
  %v81 = vld [vmem:[%s70 + $0x8] sm:$0xff]
  %v82 = vld [vmem:[%s58] sm:$0xff]
  %v83 = vld [vmem:[%s58 + $0x8] sm:$0xff]
  %v84 = vsub.f32 %v80, %v82
  %v85 = vsub.f32 %v81, %v83
  %v86 = vand.u32 2147483647, %v84
  %v87 = vand.u32 2147483647, %v85
  %v88 = vld [vmem:[#allocation2] sm:$0xff]
  %v89 = vadd.f32 %v86, %v87
  %v90 = vadd.f32 %v88, %v89
  %91 = vst [vmem:[#allocation2] sm:$0xff] %v90
  // Predicated region
  $region14: #{logistic_loss.1} parent=0 // pred_check
    %p92 = pneg %p75
  $region15: #{logistic_loss.1} parent=0 // pred_check_branch
    %94 = sbr.rel (%p92) target = $region17
  $region16: #{logistic_loss.1} parent=0 // pred_region
    %v95 = vld [vmem:[#allocation2] sm:$0xff]
    %96 = vst [vmem:[%s2] sm:$0xff] %v95
  $region17: #{logistic_loss.1} parent=0 // pred_fallthru
    _
  // Predicated region
  $region18: #{logistic_loss.1} parent=0 // pred_check
    _
  $region19: #{logistic_loss.1} parent=0 // pred_check_branch
    %98 = sbr.rel (0) target = $region21
  $region20: #{logistic_loss.1} parent=0 // pred_region
    _
  $region21: #{logistic_loss.1} parent=0 // pred_fallthru
    _
  // Predicated region
  $region22: #{logistic_loss.1} parent=0 // pred_check
    _
  $region23: #{logistic_loss.1} parent=0 // pred_check_branch
    %100 = sbr.rel (0) target = $region25
  $region24: #{logistic_loss.1} parent=0 // pred_region
    _
  $region25: #{logistic_loss.1} parent=0 // pred_fallthru
    _

</llo_original>
